<compile_context>
chip_gen: v5e
topology: v5e:2x2
jax: 0.10.0
libtpu: 0.0.40
codegen_flags: <defaults>
</compile_context>

<pallas_src>
import functools

import jax
import jax.numpy as jnp
from jax.experimental import pallas as pl
from jax.experimental.pallas import tpu as pltpu

LN_EPS = 1e-5

_PARALLEL = pltpu.CompilerParams(dimension_semantics=("parallel",))


# --------------------------- in-kernel helpers (f32) --------------------------

def _ln(x, g, b):
    mu = jnp.mean(x, axis=-1, keepdims=True)
    var = jnp.mean(jnp.square(x - mu), axis=-1, keepdims=True)
    return (x - mu) * jax.lax.rsqrt(var + LN_EPS) * g + b


def _mha(y, to, wq, wkv, wo, bo, *, n_heads, head_dim, scale):
    """Multi-head attention on VMEM-resident values.

    y  : (L_fr, D)  query-side input (already LayerNormed)
    to : (L_to, D)  key/value-side input
    Heads are static lane slices of q / kv; each head's output is folded
    straight into the output projection, so no transpose/concat materializes.
    """
    q = jnp.dot(y, wq, preferred_element_type=jnp.float32)       # (L_fr, inner)
    kv = jnp.dot(to, wkv, preferred_element_type=jnp.float32)    # (L_to, 2*inner)
    acc = jnp.zeros((y.shape[0], wo.shape[1]), jnp.float32)      # (L_fr, D)
    for h in range(n_heads):
        qh = q[:, h * head_dim:(h + 1) * head_dim]                        # (L_fr, hd)
        kh = kv[:, 2 * h * head_dim: 2 * h * head_dim + head_dim]         # (L_to, hd)
        vh = kv[:, 2 * h * head_dim + head_dim: 2 * (h + 1) * head_dim]   # (L_to, hd)
        s = jax.lax.dot_general(
            qh, kh, (((1,), (1,)), ((), ())), preferred_element_type=jnp.float32
        ) * scale                                                          # (L_fr, L_to)
        s = s - jnp.max(s, axis=-1, keepdims=True)
        p = jnp.exp(s)
        p = p * pl.reciprocal(jnp.sum(p, axis=-1, keepdims=True), approx=True)
        oh = jnp.dot(p, vh, preferred_element_type=jnp.float32)            # (L_fr, hd)
        acc = acc + jnp.dot(oh, wo[h * head_dim:(h + 1) * head_dim, :],
                            preferred_element_type=jnp.float32)
    return acc + bo


# ------------------------------- Pallas kernels -------------------------------

def _layernorm_kernel(x_ref, g_ref, b_ref, o_ref):
    x = x_ref[...].astype(jnp.float32)
    g = g_ref[...].astype(jnp.float32)
    b = b_ref[...].astype(jnp.float32)
    o_ref[...] = _ln(x, g, b).astype(o_ref.dtype)


def _self_attn_sublayer_kernel(x_ref, g_ref, b_ref, wq_ref, wkv_ref, wo_ref,
                               bo_ref, o_ref, *, n_heads, head_dim, scale):
    x = x_ref[...].astype(jnp.float32)
    y = _ln(x, g_ref[...].astype(jnp.float32), b_ref[...].astype(jnp.float32))
    att = _mha(y, y,
               wq_ref[...].astype(jnp.float32), wkv_ref[...].astype(jnp.float32),
               wo_ref[...].astype(jnp.float32), bo_ref[...].astype(jnp.float32),
               n_heads=n_heads, head_dim=head_dim, scale=scale)
    o_ref[...] = (x + att).astype(o_ref.dtype)


def _cross_attn_sublayer_kernel(x_ref, c_ref, g_ref, b_ref, wq_ref, wkv_ref,
                                wo_ref, bo_ref, o_ref, *, n_heads, head_dim, scale):
    x = x_ref[...].astype(jnp.float32)
    y = _ln(x, g_ref[...].astype(jnp.float32), b_ref[...].astype(jnp.float32))
    c = c_ref[...].astype(jnp.float32)        # cond, already LayerNormed once
    att = _mha(y, c,
               wq_ref[...].astype(jnp.float32), wkv_ref[...].astype(jnp.float32),
               wo_ref[...].astype(jnp.float32), bo_ref[...].astype(jnp.float32),
               n_heads=n_heads, head_dim=head_dim, scale=scale)
    o_ref[...] = (x + att).astype(o_ref.dtype)


def _ff_sublayer_kernel(x_ref, g_ref, b_ref, w1_ref, b1_ref, w2_ref, b2_ref, o_ref):
    x = x_ref[...].astype(jnp.float32)
    y = _ln(x, g_ref[...].astype(jnp.float32), b_ref[...].astype(jnp.float32))
    h = jnp.dot(y, w1_ref[...].astype(jnp.float32),
                preferred_element_type=jnp.float32) + b1_ref[...].astype(jnp.float32)
    h = jax.nn.gelu(h, approximate=False)     # matches torch.nn.GELU() (erf)
    out = jnp.dot(h, w2_ref[...].astype(jnp.float32),
                  preferred_element_type=jnp.float32) + b2_ref[...].astype(jnp.float32)
    o_ref[...] = (out + x).astype(o_ref.dtype)


# ------------------------------ call wrappers ---------------------------------

def _row_spec(rows, cols):
    # One batch's rows per grid step.
    return pl.BlockSpec((rows, cols), lambda i: (i, 0))


def _rep_spec(shape):
    # Shared (weight / bias) block, identical for every grid step.
    return pl.BlockSpec(shape, lambda i: (0, 0))


def layernorm(x, gamma, beta):
    B, L, D = x.shape
    out = pl.pallas_call(
        _layernorm_kernel,
        grid=(B,),
        in_specs=[_row_spec(L, D), _rep_spec((1, D)), _rep_spec((1, D))],
        out_specs=_row_spec(L, D),
        out_shape=jax.ShapeDtypeStruct((B * L, D), x.dtype),
        compiler_params=_PARALLEL,
    )(x.reshape(B * L, D), gamma.reshape(1, D), beta.reshape(1, D))
    return out.reshape(B, L, D)


def self_attn_sublayer(x, gamma, beta, p, n_heads, head_dim):
    B, L, D = x.shape
    inner = n_heads * head_dim
    kern = functools.partial(_self_attn_sublayer_kernel, n_heads=n_heads,
                             head_dim=head_dim, scale=head_dim ** (-0.5))
    out = pl.pallas_call(
        kern,
        grid=(B,),
        in_specs=[
            _row_spec(L, D),
            _rep_spec((1, D)), _rep_spec((1, D)),
            _rep_spec((D, inner)), _rep_spec((D, 2 * inner)),
            _rep_spec((inner, D)), _rep_spec((1, D)),
        ],
        out_specs=_row_spec(L, D),
        out_shape=jax.ShapeDtypeStruct((B * L, D), x.dtype),
        compiler_params=_PARALLEL,
    )(x.reshape(B * L, D), gamma.reshape(1, D), beta.reshape(1, D),
      p["wq"], p["wkv"], p["wo"], p["bo"].reshape(1, D))
    return out.reshape(B, L, D)


def cross_attn_sublayer(x, cond_n, gamma, beta, p, n_heads, head_dim):
    B, L, D = x.shape
    Lc = cond_n.shape[1]
    inner = n_heads * head_dim
    kern = functools.partial(_cross_attn_sublayer_kernel, n_heads=n_heads,
                             head_dim=head_dim, scale=head_dim ** (-0.5))
    out = pl.pallas_call(
        kern,
        grid=(B,),
        in_specs=[
            _row_spec(L, D),
            _row_spec(Lc, D),
            _rep_spec((1, D)), _rep_spec((1, D)),
            _rep_spec((D, inner)), _rep_spec((D, 2 * inner)),
            _rep_spec((inner, D)), _rep_spec((1, D)),
        ],
        out_specs=_row_spec(L, D),
        out_shape=jax.ShapeDtypeStruct((B * L, D), x.dtype),
        compiler_params=_PARALLEL,
    )(x.reshape(B * L, D), cond_n.reshape(B * Lc, D),
      gamma.reshape(1, D), beta.reshape(1, D),
      p["wq"], p["wkv"], p["wo"], p["bo"].reshape(1, D))
    return out.reshape(B, L, D)


def ff_sublayer(x, gamma, beta, p):
    B, L, D = x.shape
    H = p["w1"].shape[1]
    out = pl.pallas_call(
        _ff_sublayer_kernel,
        grid=(B,),
        in_specs=[
            _row_spec(L, D),
            _rep_spec((1, D)), _rep_spec((1, D)),
            _rep_spec((D, H)), _rep_spec((1, H)),
            _rep_spec((H, D)), _rep_spec((1, D)),
        ],
        out_specs=_row_spec(L, D),
        out_shape=jax.ShapeDtypeStruct((B * L, D), x.dtype),
        compiler_params=_PARALLEL,
    )(x.reshape(B * L, D), gamma.reshape(1, D), beta.reshape(1, D),
      p["w1"], p["b1"].reshape(1, H), p["w2"], p["b2"].reshape(1, D))
    return out.reshape(B, L, D)


def transformer_decoder(x, cond, params, n_layers, n_heads, head_dim):
    g, b = params["ln_g"], params["ln_b"]
    cond_n = layernorm(cond, g, b)                 # shared norm applied to cond once
    for i in range(n_layers):
        x = self_attn_sublayer(x, g, b, params["attn"][i], n_heads, head_dim)
        x = cross_attn_sublayer(x, cond_n, g, b, params["crs"][i], n_heads, head_dim)
        x = ff_sublayer(x, g, b, params["ff"][i])
    return x


# --------------------------- pure-JAX reference -------------------------------

def _ref_ln(x, g, b):
    mu = jnp.mean(x, axis=-1, keepdims=True)
    var = jnp.mean(jnp.square(x - mu), axis=-1, keepdims=True)
    return (x - mu) / jnp.sqrt(var + LN_EPS) * g + b


def _ref_attn(fr, to, p, n_heads, head_dim):
    B, L_fr, D = fr.shape
    L_to = to.shape[1]
    q = (fr @ p["wq"]).reshape(B, L_fr, n_heads, head_dim).transpose(0, 2, 1, 3)
    kv = (to @ p["wkv"]).reshape(B, L_to, n_heads, 2 * head_dim).transpose(0, 2, 1, 3)
    k, v = kv[..., :head_dim], kv[..., head_dim:]
    dots = jnp.einsum("bhqd,bhkd->bhqk", q, k) * (head_dim ** (-0.5))
    attn = jax.nn.softmax(dots, axis=-1)
    out = jnp.einsum("bhqk,bhkd->bhqd", attn, v)
    out = out.transpose(0, 2, 1, 3).reshape(B, L_fr, -1)
    return out @ p["wo"] + p["bo"]


def _ref_decoder(x, cond, params, n_layers, n_heads, head_dim):
    g, b = params["ln_g"], params["ln_b"]
    cond = _ref_ln(cond, g, b)
    for i in range(n_layers):
        y = _ref_ln(x, g, b)
        x = x + _ref_attn(y, y, params["attn"][i], n_heads, head_dim)
        y = _ref_ln(x, g, b)
        x = x + _ref_attn(y, cond, params["crs"][i], n_heads, head_dim)
        y = _ref_ln(x, g, b)
        p = params["ff"][i]
        h = jax.nn.gelu(y @ p["w1"] + p["b1"], approximate=False)
        x = x + (h @ p["w2"] + p["b2"])
    return x


# ------------------------------ params ----------------------------------------

def init_params(key, dim, n_layers, n_heads, head_dim, ff_hidden_dim):
    inner = n_heads * head_dim
    ks = iter(jax.random.split(key, 2 + n_layers * 12))

    def w(shape, scale=0.05):
        return scale * jax.random.normal(next(ks), shape, jnp.float32)

    params = {
        "ln_g": 1.0 + 0.1 * jax.random.normal(next(ks), (dim,), jnp.float32),
        "ln_b": 0.1 * jax.random.normal(next(ks), (dim,), jnp.float32),
        "attn": [],
        "crs": [],
        "ff": [],
    }

    def attn_p():
        return {
            "wq": w((dim, inner)),
            "wkv": w((dim, 2 * inner)),
            "wo": w((inner, dim)),
            "bo": w((dim,)),
        }

    for _ in range(n_layers):
        params["attn"].append(attn_p())
        params["crs"].append(attn_p())
        params["ff"].append(
            {
                "w1": w((dim, ff_hidden_dim)),
                "b1": w((ff_hidden_dim,)),
                "w2": w((ff_hidden_dim, dim)),
                "b2": w((dim,)),
            }
        )
    return params


# -------------------------------- main -----------------------------------------

if __name__ == "__main__":
    dim, n_layers, n_heads, head_dim, ff_hidden = 32, 2, 4, 8, 64
    B, L_x, L_c = 2, 8, 8

    key = jax.random.PRNGKey(0)
    kx, kc, kp = jax.random.split(key, 3)
    x = jax.random.normal(kx, (B, L_x, dim), jnp.float32)
    cond = jax.random.normal(kc, (B, L_c, dim), jnp.float32)
    params = init_params(kp, dim, n_layers, n_heads, head_dim, ff_hidden)

    out = transformer_decoder(x, cond, params, n_layers, n_heads, head_dim)
    out = jax.block_until_ready(out)

    ref = _ref_decoder(x, cond, params, n_layers, n_heads, head_dim)
    assert out.shape == (B, L_x, dim)
    if not bool(jnp.allclose(out, ref, atol=1e-3, rtol=1e-3)):
        raise AssertionError("Pallas output does not match JAX reference")

    print("KERNEL_OK")
</pallas_src>

<mosaic_0001>
module attributes {stable_mosaic.version = 11 : i64} {
  func.func @_layernorm_kernel(%arg0: i32, %arg1: memref<8x32xf32, #tpu.memory_space<vmem>>, %arg2: memref<1x32xf32, #tpu.memory_space<vmem>>, %arg3: memref<1x32xf32, #tpu.memory_space<vmem>>, %arg4: memref<8x32xf32, #tpu.memory_space<vmem>>) attributes {dimension_semantics = [#tpu.dimension_semantics<parallel>], iteration_bounds = array<i64: 2>, scalar_prefetch = 0 : i64, scratch_operands = 0 : i64, tpu.core_type = #tpu.core_type<tc>, window_params = [{transform_indices = @transform_0, window_bounds = array<i64: 8, 32>}, {pipeline_mode = #tpu.pipeline_mode<synchronous>, transform_indices = @transform_1, window_bounds = array<i64: 1, 32>}, {pipeline_mode = #tpu.pipeline_mode<synchronous>, transform_indices = @transform_2, window_bounds = array<i64: 1, 32>}, {transform_indices = @transform_3, window_bounds = array<i64: 8, 32>}]} {
    %c0 = arith.constant 0 : index
    %c0_0 = arith.constant 0 : index
    %0 = vector.load %arg1[%c0, %c0_0] : memref<8x32xf32, #tpu.memory_space<vmem>>, vector<8x32xf32>
    %c0_1 = arith.constant 0 : index
    %c0_2 = arith.constant 0 : index
    %1 = vector.load %arg2[%c0_1, %c0_2] : memref<1x32xf32, #tpu.memory_space<vmem>>, vector<1x32xf32>
    %c0_3 = arith.constant 0 : index
    %c0_4 = arith.constant 0 : index
    %2 = vector.load %arg3[%c0_3, %c0_4] : memref<1x32xf32, #tpu.memory_space<vmem>>, vector<1x32xf32>
    %cst = arith.constant dense<0.000000e+00> : vector<8xf32>
    %3 = vector.multi_reduction <add>, %0, %cst [1] : vector<8x32xf32> to vector<8xf32>
    %4 = vector.shape_cast %3 : vector<8xf32> to vector<8x1xf32>
    %cst_5 = arith.constant 3.200000e+01 : f32
    %5 = vector.broadcast %cst_5 : f32 to vector<8x1xf32>
    %6 = arith.divf %4, %5 : vector<8x1xf32>
    %7 = vector.broadcast %6 : vector<8x1xf32> to vector<8x32xf32>
    %8 = arith.subf %0, %7 : vector<8x32xf32>
    %9 = arith.mulf %8, %8 : vector<8x32xf32>
    %cst_6 = arith.constant dense<0.000000e+00> : vector<8xf32>
    %10 = vector.multi_reduction <add>, %9, %cst_6 [1] : vector<8x32xf32> to vector<8xf32>
    %11 = vector.shape_cast %10 : vector<8xf32> to vector<8x1xf32>
    %cst_7 = arith.constant 3.200000e+01 : f32
    %12 = vector.broadcast %cst_7 : f32 to vector<8x1xf32>
    %13 = arith.divf %11, %12 : vector<8x1xf32>
    %14 = vector.broadcast %6 : vector<8x1xf32> to vector<8x32xf32>
    %15 = arith.subf %0, %14 : vector<8x32xf32>
    %cst_8 = arith.constant 9.99999974E-6 : f32
    %16 = vector.broadcast %cst_8 : f32 to vector<8x1xf32>
    %17 = arith.addf %13, %16 : vector<8x1xf32>
    %18 = math.rsqrt %17 : vector<8x1xf32>
    %19 = vector.broadcast %18 : vector<8x1xf32> to vector<8x32xf32>
    %20 = arith.mulf %15, %19 : vector<8x32xf32>
    %21 = vector.broadcast %1 : vector<1x32xf32> to vector<8x32xf32>
    %22 = arith.mulf %20, %21 : vector<8x32xf32>
    %23 = vector.broadcast %2 : vector<1x32xf32> to vector<8x32xf32>
    %24 = arith.addf %22, %23 : vector<8x32xf32>
    %c0_9 = arith.constant 0 : index
    %c0_10 = arith.constant 0 : index
    %25 = vector.load %arg4[%c0_9, %c0_10] : memref<8x32xf32, #tpu.memory_space<vmem>>, vector<8x32xf32>
    tpu.vector_store %arg4[%c0_9, %c0_10], %24 {strides = array<i32>} : memref<8x32xf32, #tpu.memory_space<vmem>>, vector<8x32xf32>,
    return
  }
  func.func @transform_0(%arg0: i32) -> (i32, i32) {
    %c0_i32 = arith.constant 0 : i32
    %c0_i32_0 = arith.constant 0 : i32
    return %arg0, %c0_i32 : i32, i32
  }
  func.func @transform_1(%arg0: i32) -> (i32, i32) {
    %c0_i32 = arith.constant 0 : i32
    %c0_i32_0 = arith.constant 0 : i32
    %c0_i32_1 = arith.constant 0 : i32
    return %c0_i32, %c0_i32_0 : i32, i32
  }
  func.func @transform_2(%arg0: i32) -> (i32, i32) {
    %c0_i32 = arith.constant 0 : i32
    %c0_i32_0 = arith.constant 0 : i32
    %c0_i32_1 = arith.constant 0 : i32
    return %c0_i32, %c0_i32_0 : i32, i32
  }
  func.func @transform_3(%arg0: i32) -> (i32, i32) {
    %c0_i32 = arith.constant 0 : i32
    %c0_i32_0 = arith.constant 0 : i32
    return %arg0, %c0_i32 : i32, i32
  }
}

</mosaic_0001>

<llo_original>
// kernel: tpu_custom_call.1
$region0: #{tpu_custom_call.1}
  #allocation0 [shape = 'u32[]', space=smem, size = 0x4, offset = 0x4, fixed_abs, tag = 'smem constant byte address 0x4 - core index']
  #allocation1 [shape = 'u32[72,128]{1,0:T(1,128)}', space=vmem, size = 0x9000, scoped, tag = 'internal scratch']
  %s0 = inlined_call_operand.hbm [shape: f32[16,32], index: 0, kind: input, shape index: {}]
  %s1 = inlined_call_operand.hbm [shape: f32[1,32], index: 1, kind: input, shape index: {}]
  %s2 = inlined_call_operand.vmem [shape: f32[1,32], index: 2, kind: input, shape index: {}]
  %s3 = inlined_call_operand.hbm [shape: f32[16,32], index: 3, kind: output, shape index: {}]
  %s4 = sld [smem:[#allocation0]]
  $region53: #{tpu_custom_call.1} parent=0
    _
  %s6 = ssub.s32 1, %s4
  %s7 = scalar_select 0, %s6, %s4
  $region1: #{tpu_custom_call.1} parent=0
    #allocation2 [shape = 'u8[8192]{0}', space=vmem, size = 0x2000, scoped, tag = 'input window, operand 0']
    #allocation3 [shape = 's32[2]{0}', space=sflag, size = 0x8, scoped, tag = 'scoped memory for tpu_custom_call.1']
    #allocation4 [shape = 's32[2]{0}', space=sflag, size = 0x8, scoped, tag = 'scoped memory for tpu_custom_call.1']
    #allocation5 [shape = 'u8[512]{0}', space=vmem, size = 0x400, scoped, tag = 'input window, operand 1, single buffered']
    #allocation6 [shape = 's32[1]{0}', space=sflag, size = 0x4, scoped, tag = 'scoped memory for tpu_custom_call.1']
    #allocation7 [shape = 'u8[8192]{0}', space=vmem, size = 0x2000, scoped, tag = 'output window, operand 0']
    %8 = vsyncpa [#allocation3], 0
    %s9 = scalar_lea.sflag [#allocation3], 1
    %10 = vsyncpa %s9, 0
    %11 = vsyncpa [#allocation6], 0
    %12 = vsyncpa [#allocation4], 0
    %s13 = scalar_lea.sflag [#allocation4], 1
    %14 = vsyncpa %s13, 0
    loop: start=0, step=1, limit=4
    $region2: #{tpu_custom_call.1} parent=1 // loop_pre_header
      _
    $region3: #{tpu_custom_call.1} parent=1 // loop_header
      %s16 = sphi 0, %s20
      %p17 = scmp.ge.s32.totalorder %s16, 4
      %s26 = sphi 0, %s28
      %s29 = sphi 0, %s26
      %s30 = sphi 0, %s29
      %s46 = sphi 0, %s30
      %s50 = sphi 0, %s50
      %s52 = sphi 0, %s50
      %s53 = sphi 0, %s52
      %s67 = sphi 0, %s53
      %s71 = sphi 0, %s71
      %s73 = sphi 0, %s71
      %s74 = sphi 0, %s73
      %s88 = sphi 0, %s74
      %s94 = sphi 0, %s96
      %s97 = sphi 0, %s94
      %s98 = sphi 0, %s97
      %s114 = sphi 0, %s98
    $region4: #{tpu_custom_call.1} parent=1 // loop_header_branch
      %19 = sbr.rel (%p17) target = $region8
    $region5: #{tpu_custom_call.1} parent=1 // loop_body
      %s21 = ssub.s32 %s16, 1
      %s22 = ssub.s32 %s16, 2
      %s23 = sadd.s32 %s16, 1
      %s24 = ssub.s32 %s16, %s23
      %p25 = scmp.eq.s32.totalorder %s24, 0
      %s27 = sadd.s32 %s26, 1
      %s28 = scalar_select %p25, %s26, %s27
      %p31 = pneg %p25
      %p32 = scmp.eq.s32.totalorder %s16, 1
      %p33 = por %p31, %p32
      %p34 = scmp.ne.s32.totalorder %s26, %s29
      %p35 = scmp.eq.s32.totalorder %s16, 0
      %p36 = por %p34, %p35
      %p37 = scmp.ne.s32.totalorder %s26, %s29
      %p38 = scmp.eq.s32.totalorder %s21, 1
      %p39 = por %p37, %p38
      %p40 = scmp.ne.s32.totalorder %s29, %s30
      %p41 = scmp.eq.s32.totalorder %s21, 0
      %p42 = por %p40, %p41
      %p43 = scmp.ne.s32.totalorder %s29, %s30
      %p44 = scmp.eq.s32.totalorder %s22, 1
      %p45 = por %p43, %p44
      %p47 = scmp.ne.s32.totalorder %s30, %s46
      %p48 = scmp.eq.s32.totalorder %s22, 0
      %p49 = por %p47, %p48
      %s51 = sadd.s32 %s50, 1
      %p54 = scmp.eq.s32.totalorder %s16, 1
      %p55 = scmp.ne.s32.totalorder %s50, %s52
      %p56 = scmp.eq.s32.totalorder %s16, 0
      %p57 = por %p55, %p56
      %p58 = scmp.ne.s32.totalorder %s50, %s52
      %p59 = scmp.eq.s32.totalorder %s21, 1
      %p60 = por %p58, %p59
      %p61 = scmp.ne.s32.totalorder %s52, %s53
      %p62 = scmp.eq.s32.totalorder %s21, 0
      %p63 = por %p61, %p62
      %p64 = scmp.ne.s32.totalorder %s52, %s53
      %p65 = scmp.eq.s32.totalorder %s22, 1
      %p66 = por %p64, %p65
      %p68 = scmp.ne.s32.totalorder %s53, %s67
      %p69 = scmp.eq.s32.totalorder %s22, 0
      %p70 = por %p68, %p69
      %s72 = sadd.s32 %s71, 1
      %p75 = scmp.eq.s32.totalorder %s16, 1
      %p76 = scmp.ne.s32.totalorder %s71, %s73
      %p77 = scmp.eq.s32.totalorder %s16, 0
      %p78 = por %p76, %p77
      %p79 = scmp.ne.s32.totalorder %s71, %s73
      %p80 = scmp.eq.s32.totalorder %s21, 1
      %p81 = por %p79, %p80
      %p82 = scmp.ne.s32.totalorder %s73, %s74
      %p83 = scmp.eq.s32.totalorder %s21, 0
      %p84 = por %p82, %p83
      %p85 = scmp.ne.s32.totalorder %s73, %s74
      %p86 = scmp.eq.s32.totalorder %s22, 1
      %p87 = por %p85, %p86
      %p89 = scmp.ne.s32.totalorder %s74, %s88
      %p90 = scmp.eq.s32.totalorder %s22, 0
      %p91 = por %p89, %p90
      %s92 = ssub.s32 %s16, %s23
      %p93 = scmp.eq.s32.totalorder %s92, 0
      %s95 = sadd.s32 %s94, 1
      %s96 = scalar_select %p93, %s94, %s95
      %p99 = pneg %p93
      %p100 = scmp.eq.s32.totalorder %s16, 1
      %p101 = por %p99, %p100
      %p102 = scmp.ne.s32.totalorder %s94, %s97
      %p103 = scmp.eq.s32.totalorder %s16, 0
      %p104 = por %p102, %p103
      %p105 = scmp.ne.s32.totalorder %s94, %s97
      %p106 = scmp.eq.s32.totalorder %s21, 1
      %p107 = por %p105, %p106
      %p108 = scmp.ne.s32.totalorder %s97, %s98
      %p109 = scmp.eq.s32.totalorder %s21, 0
      %p110 = por %p108, %p109
      %p111 = scmp.ne.s32.totalorder %s97, %s98
      %p112 = scmp.eq.s32.totalorder %s22, 1
      %p113 = por %p111, %p112
      %p115 = scmp.ne.s32.totalorder %s98, %s114
      %p116 = scmp.eq.s32.totalorder %s22, 0
      %p117 = por %p115, %p116
      %p118 = scmp.le.s32.totalorder 1, %s16
      %p119 = scmp.lt.s32.totalorder %s16, 3
      %p120 = pnand %p118, %p119
      %p121 = pneg %p120
      // Predicated region
      $region9: #{tpu_custom_call.1} parent=5 // pred_check
        _
      $region10: #{tpu_custom_call.1} parent=5 // pred_check_branch
        %123 = sbr.rel (%p120) target = $region12
      $region11: #{tpu_custom_call.1} parent=5 // pred_region
        %s124 = ssub.s32 %s16, 1
        // Predicated region
        $region13: #{tpu_custom_call.1} parent=11 // pred_check
          %p125 = pneg %p63
        $region14: #{tpu_custom_call.1} parent=11 // pred_check_branch
          %127 = sbr.rel (%p125) target = $region16
        $region15: #{tpu_custom_call.1} parent=11 // pred_region
          %129 = vsyncadd [#allocation6], 0
          %s131 = sshll.u32 %s1, 4
          %s132 = int_to_ptr.hbm [resolvable:$true] %s131
          %s133 = sshll.u32 [#allocation5], 4
          %s134 = int_to_ptr.vmem [resolvable:$true] %s133
          %136 = dma.hbm_to_vmem [thread:$0]  %s132, 16, %s134, [#allocation6]
        $region16: #{tpu_custom_call.1} parent=11 // pred_fallthru
          _
        // Predicated region
        $region17: #{tpu_custom_call.1} parent=11 // pred_check
          %p137 = pneg %p84
        $region18: #{tpu_custom_call.1} parent=11 // pred_check_branch
          %139 = sbr.rel (%p137) target = $region20
        $region19: #{tpu_custom_call.1} parent=11 // pred_region
          _
        $region20: #{tpu_custom_call.1} parent=11 // pred_fallthru
          _
      $region12: #{tpu_custom_call.1} parent=5 // pred_fallthru
        _
      %p140 = scmp.lt.s32.totalorder %s16, 2
      // Predicated region
      $region21: #{tpu_custom_call.1} parent=5 // pred_check
        %p141 = pneg %p140
      $region22: #{tpu_custom_call.1} parent=5 // pred_check_branch
        %143 = sbr.rel (%p141) target = $region24
      $region23: #{tpu_custom_call.1} parent=5 // pred_region
        // Predicated region
        $region25: #{tpu_custom_call.1} parent=23 // pred_check
          %p144 = pneg %p36
        $region26: #{tpu_custom_call.1} parent=23 // pred_check_branch
          %146 = sbr.rel (%p144) target = $region28
        $region27: #{tpu_custom_call.1} parent=23 // pred_region
          %s147 = sand.u32 %s26, 1
          %s148 = scalar_lea.sflag [#allocation3], %s147
          %s149 = sand.u32 %s26, 1
          %s150 = smul.addr %s149, 8
          %s151 = scalar_lea.vmem [#allocation2], %s150
          %153 = vsyncadd %s148, 0
          %s154 = smul.addr %s16, 8
          %s155 = scalar_lea.hbm %s0, %s154
          %s157 = sshll.u32 %s155, 4
          %s158 = int_to_ptr.hbm [resolvable:$true] %s157
          %s159 = sshll.u32 %s151, 4
          %s160 = int_to_ptr.vmem [resolvable:$true] %s159
          %162 = dma.hbm_to_vmem [thread:$0]  %s158, 128, %s160, %s148
        $region28: #{tpu_custom_call.1} parent=23 // pred_fallthru
          _
      $region24: #{tpu_custom_call.1} parent=5 // pred_fallthru
        _
      %p163 = scmp.le.s32.totalorder 1, %s16
      %p164 = scmp.lt.s32.totalorder %s16, 3
      %p165 = pnand %p163, %p164
      %p166 = pneg %p165
      // Predicated region
      $region29: #{tpu_custom_call.1} parent=5 // pred_check
        _
      $region30: #{tpu_custom_call.1} parent=5 // pred_check_branch
        %168 = sbr.rel (%p165) target = $region32
      $region31: #{tpu_custom_call.1} parent=5 // pred_region
        %s169 = ssub.s32 %s16, 1
        %s170 = sand.u32 %s29, 1
        %s171 = scalar_lea.sflag [#allocation3], %s170
        %s172 = sand.u32 %s29, 1
        %s173 = smul.addr %s172, 8
        %s174 = scalar_lea.vmem [#allocation2], %s173
        // Predicated region
        $region33: #{tpu_custom_call.1} parent=31 // pred_check
          %p175 = pneg %p42
        $region34: #{tpu_custom_call.1} parent=31 // pred_check_branch
          %177 = sbr.rel (%p175) target = $region36
        $region35: #{tpu_custom_call.1} parent=31 // pred_region
          %179 = dma.done %s171, 128
        $region36: #{tpu_custom_call.1} parent=31 // pred_fallthru
          _
        // Predicated region
        $region37: #{tpu_custom_call.1} parent=31 // pred_check
          %p180 = pneg %p63
        $region38: #{tpu_custom_call.1} parent=31 // pred_check_branch
          %182 = sbr.rel (%p180) target = $region40
        $region39: #{tpu_custom_call.1} parent=31 // pred_region
          %184 = dma.done [#allocation6], 16
        $region40: #{tpu_custom_call.1} parent=31 // pred_fallthru
          _
        %s185 = sand.u32 %s29, 1
        %s186 = scalar_lea.sflag [#allocation3], %s185
        %s187 = sand.u32 %s29, 1
        %s188 = smul.addr %s187, 8
        %s189 = scalar_lea.vmem [#allocation2], %s188
        %p190 = pneg %p42
        %p191 = pneg %p39
        %p192 = pneg %p63
        %p193 = pneg %p60
        %p194 = pneg %p84
        %p195 = pneg %p81
        %p196 = pneg %p110
        %p197 = pneg %p107
        %s198 = sand.u32 %s97, 1
        %s199 = scalar_lea.sflag [#allocation4], %s198
        %s200 = sand.u32 %s97, 1
        %s201 = smul.addr %s200, 8
        %s202 = scalar_lea.vmem [#allocation7], %s201
        %v203 = vld [vmem:[%s174] sm:$0xff]
        %v204 = vld [vmem:[#allocation5] sm:$0x1]
        %v205 = vld [vmem:[%s2] sm:$0x1]
        %vm206 = vcmask 261120
        %v207 = vsel %vm206, %v203, 0.0
        %208 = vadd.xlane.f32.xlu0 %v207
        %v209 = vpop.xlane.xlu0 %208
        %v210 = vrcp.pop 32.0
        %v211 = vmul.f32 32.0, %v210
        %v212 = vsub.f32 1.0, %v211
        %v213 = vmul.f32 %v210, %v212
        %v214 = vadd.f32 %v210, %v213
        %vm215 = vweird.f32 %v210
        %v216 = vsel %vm215, %v210, %v214
        %v217 = vmul.f32 %v209, %v216
        %v218 = vsub.f32 %v203, %v217
        %v219 = vmul.f32 %v218, %v218
        %v220 = vsel %vm206, %v219, 0.0
        %221 = vadd.xlane.f32.xlu0 %v220
        %v222 = vpop.xlane.xlu0 %221
        %v223 = vmul.f32 %v222, %v216
        %v224 = vadd.f32 %v223, 1e-05
        %v225 = vrsqrt.pop %v224
        %v226 = vmul.f32 %v225, %v224
        %v227 = vmul.f32 %v226, %v225
        %v228 = vmul.f32 0.5, %v227
        %v229 = vsub.f32 1.5, %v228
        %v230 = vmul.f32 %v225, %v229
        %vm231 = vweird.f32 %v224
        %vm232 = vweird.f32 %v225
        %vm233 = vmor %vm231, %vm232
        %v234 = vsel %vm233, %v225, %v230
        %v235 = vmul.f32 %v218, %v234
        %v237 = vperm.slane %v204, 0
        %v239 = vmul.f32 %v235, %v237
        %v241 = vperm.slane %v205, 0
        %v243 = vadd.f32 %v239, %v241
        %244 = vst.msk [vmem:[%s202] sm:$0xff] %vm206, %v243
        %s245 = sand.u32 %s97, 1
        %s246 = scalar_lea.sflag [#allocation4], %s245
        %s247 = sand.u32 %s97, 1
        %s248 = smul.addr %s247, 8
        %s249 = scalar_lea.vmem [#allocation7], %s248
        // Predicated region
        $region41: #{tpu_custom_call.1} parent=31 // pred_check
          %p250 = pneg %p107
        $region42: #{tpu_custom_call.1} parent=31 // pred_check_branch
          %252 = sbr.rel (%p250) target = $region44
        $region43: #{tpu_custom_call.1} parent=31 // pred_region
          %254 = vsyncadd %s246, 0
          %s255 = smul.addr %s21, 8
          %s256 = scalar_lea.hbm %s3, %s255
          %s258 = sshll.u32 %s249, 4
          %s259 = int_to_ptr.vmem [resolvable:$true] %s258
          %s260 = sshll.u32 %s256, 4
          %s261 = int_to_ptr.hbm [resolvable:$true] %s260
          %263 = dma.vmem_to_hbm [thread:$0]  %s259, 128, %s261, %s246
        $region44: #{tpu_custom_call.1} parent=31 // pred_fallthru
          _
      $region32: #{tpu_custom_call.1} parent=5 // pred_fallthru
        _
      %p264 = scmp.le.s32.totalorder 2, %s16
      // Predicated region
      $region45: #{tpu_custom_call.1} parent=5 // pred_check
        %p265 = pneg %p264
      $region46: #{tpu_custom_call.1} parent=5 // pred_check_branch
        %267 = sbr.rel (%p265) target = $region48
      $region47: #{tpu_custom_call.1} parent=5 // pred_region
        %s268 = ssub.s32 %s16, 2
        // Predicated region
        $region49: #{tpu_custom_call.1} parent=47 // pred_check
          %p269 = pneg %p113
        $region50: #{tpu_custom_call.1} parent=47 // pred_check_branch
          %271 = sbr.rel (%p269) target = $region52
        $region51: #{tpu_custom_call.1} parent=47 // pred_region
          %s272 = sand.u32 %s98, 1
          %s273 = scalar_lea.sflag [#allocation4], %s272
          %s274 = sand.u32 %s98, 1
          %s275 = smul.addr %s274, 8
          %s276 = scalar_lea.vmem [#allocation7], %s275
          %278 = dma.done %s273, 128
        $region52: #{tpu_custom_call.1} parent=47 // pred_fallthru
          _
      $region48: #{tpu_custom_call.1} parent=5 // pred_fallthru
        _
    $region6: #{tpu_custom_call.1} parent=1 // loop_footer
      %s20 = sadd.s32 1, %s16
    $region7: #{tpu_custom_call.1} parent=1 // loop_footer_branch
      %15 = sbr.rel target = $region3
    $region8: #{tpu_custom_call.1} parent=1 // loop_exit
      _
    %279 = vsyncpa [#allocation3], 1
    %s280 = scalar_lea.sflag [#allocation3], 1
    %281 = vsyncpa %s280, 1
    %282 = vsyncpa [#allocation6], 1
    %283 = vsyncpa [#allocation4], 1
    %s284 = scalar_lea.sflag [#allocation4], 1
    %285 = vsyncpa %s284, 1

</llo_original>
